<compile_context>
chip_gen: v7x
topology: tpu7x:2x2x1
jax: 0.10.0
libtpu: 0.0.40
codegen_flags: <defaults>
</compile_context>

<pallas_src>
import jax
import jax.numpy as jnp
from jax.experimental import pallas as pl
from jax.experimental.pallas import tpu as pltpu


def _round_up(x, m):
    return ((x + m - 1) // m) * m


# ----------------------------------------------------------------------------
# Tile selection.  Every block dim is either a multiple of the (8, 128) min
# tile or spans the full array dim, so no jnp.pad / output slice is needed in
# the common case.
# ----------------------------------------------------------------------------
_MAX_T = 512  # safe on v5e/v6e/v7x; per-call working set stays < ~5 MiB


def _pick_kn_tiles(E, D):
    if D <= _MAX_T:
        tk, Kp = D, D                       # whole embedding dim in one block
    else:
        tk, Kp = _MAX_T, _round_up(D, _MAX_T)
    if E <= _MAX_T:
        tn, Np = E, E                       # whole entity axis in one block
    else:
        tn, Np = _MAX_T, _round_up(E, _MAX_T)
    return tk, Kp, tn, Np


def _pick_m_tile(B):
    if B <= _MAX_T:
        return B, B
    return _MAX_T, _round_up(B, _MAX_T)


# ----------------------------------------------------------------------------
# Kernels:  out = sigmoid(q @ ent_t)     (ent_t stored (D, E) -> plain matmul)
# ----------------------------------------------------------------------------
def _sigmoid_f32(x):
    # exp and approx-reciprocal both run in the EUP slot; clamp keeps the
    # approximate reciprocal from ever exceeding 1.0.
    return jnp.minimum(pl.reciprocal(1.0 + jnp.exp(-x), approx=True), 1.0)


def _distmult_kernel_1k(q_ref, ent_ref, o_ref):
    # Single K block: no accumulator, no RMW -- compute, activate, store.
    s = jnp.dot(q_ref[...], ent_ref[...], preferred_element_type=jnp.float32)
    o_ref[...] = _sigmoid_f32(s).astype(o_ref.dtype)


def _distmult_kernel_nk(q_ref, ent_ref, o_ref, acc_ref):
    # Multi K block (embedding_dim > 512): f32 scratch accumulator, output
    # block written only on the last K step.
    k = pl.program_id(2)
    s = jnp.dot(q_ref[...], ent_ref[...], preferred_element_type=jnp.float32)

    @pl.when(k == 0)
    def _():
        acc_ref[...] = s

    @pl.when(k > 0)
    def _():
        acc_ref[...] += s

    @pl.when(k == pl.num_programs(2) - 1)
    def _():
        o_ref[...] = _sigmoid_f32(acc_ref[...]).astype(o_ref.dtype)


# ----------------------------------------------------------------------------
# One-time entity-table preparation (hoisted out of the per-call path).
# ----------------------------------------------------------------------------
def prepare_entity_table(emb_e):
    """bf16, transposed to (D, E), zero-padded to the kernel's tile grid."""
    E, D = emb_e.shape
    _, Kp, _, Np = _pick_kn_tiles(E, D)
    t = emb_e.astype(jnp.bfloat16).T                     # (D, E)
    if (Kp, Np) != (D, E):
        t = jnp.pad(t, ((0, Kp - D), (0, Np - E)))       # zeros: safe in K-sum
    return t


# ----------------------------------------------------------------------------
# Fused scores:  sigmoid(q @ emb_e.T)  via one pallas_call.
# ----------------------------------------------------------------------------
def distmult_scores(q, ent_t, num_entities, *, out_dtype=jnp.bfloat16):
    B, D = q.shape
    E = num_entities
    tk, Kp, tn, Np = _pick_kn_tiles(E, D)
    assert ent_t.shape == (Kp, Np), (ent_t.shape, (Kp, Np))
    tm, Mp = _pick_m_tile(B)

    q = q.astype(jnp.bfloat16)
    if (Mp, Kp) != (B, D):                               # only for B>512 / D>512
        q = jnp.pad(q, ((0, Mp - B), (0, Kp - D)))

    n_n, n_m, n_k = Np // tn, Mp // tm, Kp // tk
    out_shape = jax.ShapeDtypeStruct((B, E), out_dtype)  # exact: no slice copy
    cparams = dict(vmem_limit_bytes=32 * 1024 * 1024)

    if n_k == 1:
        return pl.pallas_call(
            _distmult_kernel_1k,
            out_shape=out_shape,
            grid_spec=pltpu.PrefetchScalarGridSpec(
                num_scalar_prefetch=0,
                grid=(n_n, n_m),                          # entities outermost
                in_specs=[
                    pl.BlockSpec((tm, tk), lambda j, i: (i, 0)),   # q
                    pl.BlockSpec((tk, tn), lambda j, i: (0, j)),   # emb_e.T
                ],
                out_specs=pl.BlockSpec((tm, tn), lambda j, i: (i, j)),
            ),
            compiler_params=pltpu.CompilerParams(
                dimension_semantics=("parallel", "parallel"), **cparams),
        )(q, ent_t)

    return pl.pallas_call(
        _distmult_kernel_nk,
        out_shape=out_shape,
        grid_spec=pltpu.PrefetchScalarGridSpec(
            num_scalar_prefetch=0,
            grid=(n_n, n_m, n_k),
            in_specs=[
                pl.BlockSpec((tm, tk), lambda j, i, k: (i, k)),    # q
                pl.BlockSpec((tk, tn), lambda j, i, k: (k, j)),    # emb_e.T
            ],
            out_specs=pl.BlockSpec((tm, tn), lambda j, i, k: (i, j)),
            scratch_shapes=[pltpu.VMEM((tm, tn), jnp.float32)],
        ),
        compiler_params=pltpu.CompilerParams(
            dimension_semantics=("parallel", "parallel", "arbitrary"),
            **cparams),
    )(q, ent_t)


# ----------------------------------------------------------------------------
# Parameters (shapes from DistMult.__init__ / init())
# ----------------------------------------------------------------------------
def init_params(key, num_entities, num_relations, embedding_dim):
    k_e, k_r = jax.random.split(key, 2)

    def xavier(k, shape):
        fan_in, fan_out = shape[-2], shape[-1]
        std = (2.0 / (fan_in + fan_out)) ** 0.5
        return std * jax.random.normal(k, shape, jnp.float32)

    emb_e = xavier(k_e, (num_entities, embedding_dim)).at[0].set(0.0)   # padding_idx=0
    emb_rel = xavier(k_r, (num_relations, embedding_dim)).at[0].set(0.0)
    return {
        "emb_e": emb_e,
        "emb_rel": emb_rel,
        # Pre-cast / pre-transposed / pre-padded bf16 entity table (built once;
        # rebuild with prepare_entity_table if emb_e is updated).
        "ent_t": prepare_entity_table(emb_e),
    }


# ----------------------------------------------------------------------------
# Forward pass (matches DistMult.forward in eval mode)
# ----------------------------------------------------------------------------
def distmult_forward(params, e1, rel):
    emb_e = params["emb_e"]
    D = emb_e.shape[1]

    e1_emb = emb_e[e1.reshape(-1)].reshape(-1, D)                  # (B, D)
    rel_emb = params["emb_rel"][rel.reshape(-1)].reshape(-1, D)    # (B, D)

    # TODO(synk): inp_drop (Dropout) is identity at inference time.
    q = e1_emb * rel_emb                                           # tiny glue op

    # Fused: sigmoid(q @ emb_e.T)
    return distmult_scores(q, params["ent_t"], emb_e.shape[0])     # (B, E) bf16


# ----------------------------------------------------------------------------
if __name__ == "__main__":
    num_entities = 64
    num_relations = 16
    embedding_dim = 32
    batch_size = 8

    key = jax.random.PRNGKey(0)
    k_params, k_e1, k_rel = jax.random.split(key, 3)

    params = init_params(k_params, num_entities, num_relations, embedding_dim)

    e1 = jax.random.randint(k_e1, (batch_size, 1), 1, num_entities, jnp.int32)
    rel = jax.random.randint(k_rel, (batch_size, 1), 1, num_relations, jnp.int32)

    pred = jax.jit(distmult_forward)(params, e1, rel)
    pred = jax.block_until_ready(pred)

    assert pred.shape == (batch_size, num_entities), pred.shape
    pred_f32 = pred.astype(jnp.float32)
    assert bool(jnp.all(jnp.isfinite(pred_f32)))
    assert bool(jnp.all((pred_f32 >= 0.0) & (pred_f32 <= 1.0)))

    # Reference check (pure JAX, f32) with a loose bf16 tolerance.
    q = params["emb_e"][e1.reshape(-1)] * params["emb_rel"][rel.reshape(-1)]
    ref = jax.nn.sigmoid(q @ params["emb_e"].T)
    err = float(jnp.max(jnp.abs(pred_f32 - ref)))
    assert err < 2e-2, err

    print("KERNEL_OK")
</pallas_src>

<mosaic_0001>
module attributes {stable_mosaic.version = 11 : i64} {
  func.func @_distmult_kernel_1k(%arg0: i32, %arg1: i32, %arg2: memref<8x32xbf16, #tpu.memory_space<vmem>>, %arg3: memref<32x64xbf16, #tpu.memory_space<vmem>>, %arg4: memref<8x64xbf16, #tpu.memory_space<vmem>>) attributes {dimension_semantics = [#tpu.dimension_semantics<parallel>, #tpu.dimension_semantics<parallel>], iteration_bounds = array<i64: 1, 1>, scalar_prefetch = 0 : i64, scratch_operands = 0 : i64, tpu.core_type = #tpu.core_type<tc>, window_params = [{transform_indices = @transform_0, window_bounds = array<i64: 8, 32>}, {transform_indices = @transform_1, window_bounds = array<i64: 32, 64>}, {transform_indices = @transform_2, window_bounds = array<i64: 8, 64>}]} {
    %c0 = arith.constant 0 : index
    %c0_0 = arith.constant 0 : index
    %0 = vector.load %arg2[%c0, %c0_0] : memref<8x32xbf16, #tpu.memory_space<vmem>>, vector<8x32xbf16>
    %c0_1 = arith.constant 0 : index
    %c0_2 = arith.constant 0 : index
    %1 = vector.load %arg3[%c0_1, %c0_2] : memref<32x64xbf16, #tpu.memory_space<vmem>>, vector<32x64xbf16>
    %cst = arith.constant dense<0.000000e+00> : vector<8x64xf32>
    %2 = tpu.matmul %0, %1, %cst {dimension_numbers = #tpu.dot_dimension_numbers<[1], [0], [0], [1], [0, 0, 1, 1], [], []>} : vector<8x32xbf16>, vector<32x64xbf16>, vector<8x64xf32> -> vector<8x64xf32>
    %cst_3 = arith.constant 0.000000e+00 : f32
    %3 = vector.broadcast %cst_3 : f32 to vector<8x64xf32>
    %4 = arith.subf %3, %2 : vector<8x64xf32>
    %5 = math.exp %4 : vector<8x64xf32>
    %cst_4 = arith.constant 1.000000e+00 : f32
    %6 = vector.broadcast %cst_4 : f32 to vector<8x64xf32>
    %7 = arith.addf %6, %5 : vector<8x64xf32>
    %8 = tpu.reciprocal %7 {approx = true} : vector<8x64xf32> -> vector<8x64xf32>
    %cst_5 = arith.constant 1.000000e+00 : f32
    %9 = vector.broadcast %cst_5 : f32 to vector<8x64xf32>
    %10 = arith.minimumf %8, %9 : vector<8x64xf32>
    %11 = arith.truncf %10 : vector<8x64xf32> to vector<8x64xbf16>
    %c0_6 = arith.constant 0 : index
    %c0_7 = arith.constant 0 : index
    %12 = vector.load %arg4[%c0_6, %c0_7] : memref<8x64xbf16, #tpu.memory_space<vmem>>, vector<8x64xbf16>
    tpu.vector_store %arg4[%c0_6, %c0_7], %11 {strides = array<i32>} : memref<8x64xbf16, #tpu.memory_space<vmem>>, vector<8x64xbf16>,
    return
  }
  func.func @transform_0(%arg0: i32, %arg1: i32) -> (i32, i32) {
    %c0_i32 = arith.constant 0 : i32
    %c0_i32_0 = arith.constant 0 : i32
    return %arg1, %c0_i32 : i32, i32
  }
  func.func @transform_1(%arg0: i32, %arg1: i32) -> (i32, i32) {
    %c0_i32 = arith.constant 0 : i32
    %c0_i32_0 = arith.constant 0 : i32
    return %c0_i32, %arg0 : i32, i32
  }
  func.func @transform_2(%arg0: i32, %arg1: i32) -> (i32, i32) {
    %c0_i32 = arith.constant 0 : i32
    return %arg1, %arg0 : i32, i32
  }
}

</mosaic_0001>

<llo_original>
// kernel: distmult_forward.1
$region0: #{distmult_forward.1}
  #allocation0 [shape = 'u32[]', space=smem, size = 0x4, offset = 0x4, fixed_abs, tag = 'smem constant byte address 0x4 - core index']
  #allocation1 [shape = 'u32[144,128]{1,0:T(1,128)}', space=vmem, size = 0x12000, scoped, tag = 'internal scratch']
  %s0 = inlined_call_operand.vmem [shape: bf16[8,32], index: 0, kind: input, shape index: {}]
  %s1 = inlined_call_operand.vmem [shape: bf16[32,64], index: 1, kind: input, shape index: {}]
  %s2 = inlined_call_operand.hbm [shape: bf16[8,64], index: 2, kind: output, shape index: {}]
  %s3 = sld [smem:[#allocation0]]
  $region18: #{distmult_forward.1} parent=0
    _
  %s5 = ssub.s32 1, %s3
  %s6 = scalar_select 0, %s5, %s3
  $region1: #{distmult_forward.1} parent=0
    #allocation2 [shape = 'u8[2048]{0}', space=vmem, size = 0x800, scoped, tag = 'output window, operand 0, single buffered']
    #allocation3 [shape = 's32[1]{0}', space=sflag, size = 0x4, scoped, tag = 'scoped memory for distmult_forward.1']
    %7 = vsyncpa [#allocation3], 0
    // Predicated region
    $region2: #{distmult_forward.1} parent=1 // pred_check
      _
    $region3: #{distmult_forward.1} parent=1 // pred_check_branch
      %9 = sbr.rel (0) target = $region5
    $region4: #{distmult_forward.1} parent=1 // pred_region
      _
    $region5: #{distmult_forward.1} parent=1 // pred_fallthru
      _
    // Predicated region
    $region6: #{distmult_forward.1} parent=1 // pred_check
      _
    $region7: #{distmult_forward.1} parent=1 // pred_check_branch
      %11 = sbr.rel (0) target = $region9
    $region8: #{distmult_forward.1} parent=1 // pred_region
      _
    $region9: #{distmult_forward.1} parent=1 // pred_fallthru
      _
    %v13 = vld [vmem:[%s0] sm:$0xf]
    %v14 = vld [vmem:[%s1] sm:$0xf]
    %v15 = vld [vmem:[%s1 + $0x4] sm:$0xf]
    %v16 = vld [vmem:[%s1 + $0x8] sm:$0xf]
    %v17 = vld [vmem:[%s1 + $0xc] sm:$0xf]
    %v22 = vunpack.c.l.b16 %v14
    %v23 = vunpack.c.l.b16 %v15
    %v24 = vunpack.c.l.b16 %v16
    %v25 = vunpack.c.l.b16 %v17
    %v26 = vpack.c.b16 %v23, %v22
    %v27 = vpack.c.b16 %v25, %v24
    %vm30 = vcmask 261120
    %v32 = vsel %vm30, %v13, 0
    %34 = vmatprep.subr.bf16.mxu0 0
    %35 = vmatpush1.bf16.msra.mxu0 %v26
    %36 = vmatprep.subr.bf16.mxu0 0
    %37 = vmatpush1.bf16.msra.mxu0 %v27
    %38 = vmatprep.subr.bf16.mxu0 0
    %39 = vmatpush1.bf16.msra.mxu0 0
    %40 = vmatprep.subr.bf16.mxu0 0
    %41 = vmatpush1.bf16.msra.mxu0 0
    %42 = vmatprep.subr.bf16.mxu0 0
    %43 = vmatpush1.bf16.msra.mxu0 0
    %44 = vmatprep.subr.bf16.mxu0 0
    %45 = vmatpush1.bf16.msra.mxu0 0
    %46 = vmatprep.subr.bf16.mxu0 0
    %47 = vmatpush1.bf16.msra.mxu0 0
    %48 = vmatprep.subr.bf16.mxu0 0
    %49 = vmatpush1.bf16.msra.mxu0 0
    %50 = vmatprep.subr.bf16.mxu0 0
    %51 = vmatpush1.bf16.msra.mxu0 0
    %52 = vmatprep.subr.bf16.mxu0 0
    %53 = vmatpush1.bf16.msra.mxu0 0
    %54 = vmatprep.subr.bf16.mxu0 0
    %55 = vmatpush1.bf16.msra.mxu0 0
    %56 = vmatprep.subr.bf16.mxu0 0
    %57 = vmatpush1.bf16.msra.mxu0 0
    %58 = vmatprep.subr.bf16.mxu0 0
    %59 = vmatpush1.bf16.msra.mxu0 0
    %60 = vmatprep.subr.bf16.mxu0 0
    %61 = vmatpush1.bf16.msra.mxu0 0
    %62 = vmatprep.subr.bf16.mxu0 0
    %63 = vmatpush1.bf16.msra.mxu0 0
    %64 = vmatprep.subr.bf16.mxu0 0
    %65 = vmatpush1.bf16.msra.mxu0 0
    %66 = vmatprep.mubr.bf16.mxu0 0
    %67 = vmatmul.mubr.bf16.gmra.mrb[0].mxu0 %v32
    %v68 = vpop.f32.mrb[0].mxu0
    %v69 = vadd.f32 0.0, %v68
    %v70 = vpop.f32.mrb[0].mxu0
    %v71 = vpop.f32.mrb[0].mxu0
    %v72 = vpop.f32.mrb[0].mxu0
    %73 = vdwg.mxu0
    %v74 = vsub.f32 0.0, %v69
    %v75 = vmul.f32 %v74, 1.442695
    %v76 = vpow.pop %v75
    %v77 = vadd.f32 %v76, 1.0
    %v78 = vrcp.pop %v77
    %v79 = vmin.f32 %v78, 1.0
    %v80 = vpack.c.bf16 %v79, %v79
    %vm81 = vcmask 519168
    %82 = vst.msk [vmem:[#allocation2] sm:$0xf] %vm81, %v80
    // Predicated region
    $region10: #{distmult_forward.1} parent=1 // pred_check
      _
    $region11: #{distmult_forward.1} parent=1 // pred_check_branch
      %84 = sbr.rel (0) target = $region13
    $region12: #{distmult_forward.1} parent=1 // pred_region
      %s86 = ssub.s32 64, 64
      %87 = vsyncadd [#allocation3], %s86
      %s89 = sshll.u32 [#allocation2], 4
      %s90 = int_to_ptr.vmem [resolvable:$true] %s89
      %92 = dma.vmem_to_hbm [thread:$0]  %s90, 64, %s2, [#allocation3]
    $region13: #{distmult_forward.1} parent=1 // pred_fallthru
      _
    // Predicated region
    $region14: #{distmult_forward.1} parent=1 // pred_check
      _
    $region15: #{distmult_forward.1} parent=1 // pred_check_branch
      %94 = sbr.rel (0) target = $region17
    $region16: #{distmult_forward.1} parent=1 // pred_region
      %95 = dma.done [#allocation3], 64
    $region17: #{distmult_forward.1} parent=1 // pred_fallthru
      _
    %96 = vsyncpa [#allocation3], 1

</llo_original>
